<compile_context>
chip_gen: v5e
topology: v5e:2x2
jax: 0.10.0
libtpu: 0.0.40
codegen_flags: <defaults>
</compile_context>

<pallas_src>
import numpy as np
import jax
import jax.numpy as jnp
from jax import lax
from jax.experimental import pallas as pl
from jax.experimental.pallas import tpu as pltpu


# ---------------------------------------------------------------------------
# Kernels
# ---------------------------------------------------------------------------
def residual_fused_kernel(x_ref, w_ref, init_ref, out_ref):
    """Fully fused path (D <= 128 or K ~ D).

    x_ref   : (tn, R*D)  compute_dtype  -- one contiguous residual-slab per row
    w_ref   : (R*D, D)   compute_dtype  -- stacked per-unit W_r = wb_r^T @ invB_r
    init_ref: (tn, D) or (1, D) f32     -- ablation term minus mean correction
    out_ref : (tn, D)                   -- output tile
    """
    recon = lax.dot_general(
        x_ref[...], w_ref[...],
        dimension_numbers=(((1,), (0,)), ((), ())),
        preferred_element_type=jnp.float32)                  # (tn, D) f32
    out_ref[...] = (init_ref[...] + recon).astype(out_ref.dtype)


def residual_twostage_kernel(x_ref, w1_ref, w2_ref, init_ref, out_ref):
    """Two-stage path (D >> K): block-diagonal projection then reconstruction.

    x_ref   : (tn, R*D)   compute_dtype
    w1_ref  : (R*D, R*K)  compute_dtype  -- block-diag, block r = wb_r^T
    w2_ref  : (R*K, D)    f32            -- stacked (pseudo-)inverse bases
    init_ref: (tn, D) or (1, D) f32
    out_ref : (tn, D)
    """
    proj = lax.dot_general(
        x_ref[...], w1_ref[...],
        dimension_numbers=(((1,), (0,)), ((), ())),
        preferred_element_type=jnp.float32)                  # (tn, R*K) f32
    # Keep the stage-1 accumulator in f32 for stage-2 (R*K is tiny).
    recon = lax.dot_general(
        proj, w2_ref[...],
        dimension_numbers=(((1,), (0,)), ((), ())),
        preferred_element_type=jnp.float32)                  # (tn, D) f32
    out_ref[...] = (init_ref[...] + recon).astype(out_ref.dtype)


# ---------------------------------------------------------------------------
# Helpers
# ---------------------------------------------------------------------------
def _pad_lambdas(lambdas, basis_lengths, n_components, component_padding):
    """Vectorized pad_sequence + F.pad equivalent: (sum(L),) -> (R, K)."""
    lens = jnp.asarray(basis_lengths, dtype=jnp.int32)                  # (R,)
    offsets = jnp.concatenate(
        [jnp.zeros((1,), jnp.int32), jnp.cumsum(lens)[:-1]])            # (R,)
    col = jnp.arange(n_components, dtype=jnp.int32)[None, :]            # (1, K)
    idx = offsets[:, None] + col                                        # (R, K)
    valid = col < lens[:, None]
    gathered = jnp.take(lambdas, jnp.clip(idx, 0, lambdas.shape[0] - 1))
    pad_val = jnp.asarray(component_padding, lambdas.dtype)
    return jnp.where(valid, gathered, pad_val)                          # (R, K)


def _choose_batch_tile(N, R, D, compute_itemsize, out_itemsize, per_row_init,
                       batch_tile, vmem_budget_bytes=48 << 20):
    """Largest tile <= batch_tile whose double-buffered blocks fit the budget."""
    tn = min(N, batch_tile)

    def need(t):
        b = 2 * t * R * D * compute_itemsize          # x blocks (double-buffered)
        b += 2 * t * D * out_itemsize                 # out blocks
        if per_row_init:
            b += 2 * t * D * 4                        # per-row init stream (f32)
        return b

    while tn > 8 and need(tn) > vmem_budget_bytes:
        tn = max(8, tn // 2)
    return tn


# ---------------------------------------------------------------------------
# Wrapper
# ---------------------------------------------------------------------------
def residual_forward(x, residual_indices, ablated_indices, bases, inv_bases,
                     means, lambdas, basis_lengths, component_padding,
                     ablation=None, compute_dtype=jnp.bfloat16, batch_tile=512,
                     out_dtype=jnp.float32):
    """ResiDual.forward.  The per-token matmul work runs in the Pallas kernel;
    one-off terms (lambda padding, weight composition, mean correction, ablation
    reduction) are hoisted to XLA."""
    N, S, D = x.shape
    R, K, _ = bases.shape

    lam_padded = _pad_lambdas(lambdas, basis_lengths, K, component_padding)  # (R, K)
    wbases = bases * lam_padded[:, :, None]                                  # (R, K, D) f32

    # ---- terms hoisted out of the kernel (computed once, f32) ----
    # Mean correction by linearity:  c = sum_r (mean_r @ wb_r^T) @ ivb_r  -> (D,)
    proj_m = jnp.einsum('rd,rkd->rk', means, wbases)
    mean_corr = jnp.einsum('rk,rkd->d', proj_m, inv_bases)                   # (D,)

    # Ablation contribution (A == 0 is safe: empty take -> zeros).
    x_abl = jnp.take(x, ablated_indices, axis=1)                             # (N, A, D)
    if ablation is None or ablation == 'sum':
        init = (jnp.sum(x_abl, axis=1) - mean_corr[None, :]).astype(jnp.float32)  # (N, D)
        per_row_init = True
    elif ablation == 'mean':
        const = jnp.sum(jnp.mean(x_abl, axis=0), axis=0) - mean_corr         # (D,)
        init = const[None, :].astype(jnp.float32)                            # (1, D)
        per_row_init = False
    elif ablation == 'zero':
        init = (-mean_corr)[None, :].astype(jnp.float32)                     # (1, D)
        per_row_init = False
    else:
        raise ValueError(f'Invalid ablation: {ablation}')

    # ---- x stream: gather stays (N, R, D); contiguous reshape, NO transpose ----
    x_flat = jnp.take(x, residual_indices, axis=1).reshape(N, R * D)
    x_flat = x_flat.astype(compute_dtype)                                    # (N, R*D)

    # ---- weight prep: fused single matmul when D small, else packed two-stage ----
    fuse = (D <= 128) or (2 * K >= D)
    if fuse:
        # W_r = wb_r^T @ invB_r, stacked along the R*D contraction axis.
        w = jnp.einsum('rkd,rke->rde', wbases, inv_bases)                    # (R, D, D)
        w = w.reshape(R * D, D).astype(compute_dtype)
        weights = (w,)
        weight_specs = [pl.BlockSpec((R * D, D), lambda i: (0, 0))]
        kernel = residual_fused_kernel
        flops_per_row = 2 * (R * D) * D
    else:
        # Block-diagonal stage-1 weight: w1[r*D+d, s*K+k] = delta_rs * wb[r,k,d].
        w1 = jnp.einsum('rs,rkd->rdsk', jnp.eye(R, dtype=wbases.dtype), wbases)
        w1 = w1.reshape(R * D, R * K).astype(compute_dtype)                  # (R*D, R*K)
        w2 = inv_bases.reshape(R * K, D).astype(jnp.float32)                 # (R*K, D) f32
        weights = (w1, w2)
        weight_specs = [pl.BlockSpec((R * D, R * K), lambda i: (0, 0)),
                        pl.BlockSpec((R * K, D), lambda i: (0, 0))]
        kernel = residual_twostage_kernel
        flops_per_row = 2 * (R * D) * (R * K) + 2 * (R * K) * D

    # ---- batch tiling (single 'parallel' grid axis) ----
    c_isz = jnp.dtype(compute_dtype).itemsize
    o_isz = jnp.dtype(out_dtype).itemsize
    tn = _choose_batch_tile(N, R, D, c_isz, o_isz, per_row_init, batch_tile)
    n_pad = pl.cdiv(N, tn) * tn
    if n_pad != N:
        x_flat = jnp.pad(x_flat, ((0, n_pad - N), (0, 0)))
        if per_row_init:
            init = jnp.pad(init, ((0, n_pad - N), (0, 0)))

    if per_row_init:
        init_spec = pl.BlockSpec((tn, D), lambda i: (i, 0))
    else:
        init_spec = pl.BlockSpec((1, D), lambda i: (0, 0))

    # ---- compiler hints: VMEM limit + cost estimate ----
    weight_bytes = sum(int(np.prod(wi.shape)) * wi.dtype.itemsize for wi in weights)
    block_bytes = (2 * tn * R * D * c_isz + 2 * tn * D * o_isz
                   + (2 * tn * D * 4 if per_row_init else 2 * D * 4))
    vmem_limit = int(1.5 * (block_bytes + weight_bytes)) + (4 << 20)
    vmem_limit = max(8 << 20, min(vmem_limit, 56 << 20))

    bytes_accessed = (n_pad * R * D * c_isz                 # x stream
                      + int(np.prod(init.shape)) * 4        # init
                      + weight_bytes                        # weights
                      + n_pad * D * o_isz)                  # output
    cost = pl.CostEstimate(flops=n_pad * flops_per_row, transcendentals=0,
                           bytes_accessed=int(bytes_accessed))

    out = pl.pallas_call(
        kernel,
        out_shape=jax.ShapeDtypeStruct((n_pad, D), out_dtype),
        grid_spec=pltpu.PrefetchScalarGridSpec(
            num_scalar_prefetch=0,
            grid=(n_pad // tn,),
            in_specs=[pl.BlockSpec((tn, R * D), lambda i: (i, 0))]
                     + weight_specs + [init_spec],
            out_specs=pl.BlockSpec((tn, D), lambda i: (i, 0)),
        ),
        compiler_params=pltpu.CompilerParams(
            dimension_semantics=("parallel",),
            vmem_limit_bytes=vmem_limit),
        cost_estimate=cost,
    )(x_flat, *weights, init)
    return out[:N]


# ---------------------------------------------------------------------------
# Pure-JAX reference (replicates the PyTorch module exactly)
# ---------------------------------------------------------------------------
def reference_forward(x, residual_indices, ablated_indices, bases, inv_bases,
                      means, lambdas, basis_lengths, component_padding,
                      ablation=None):
    R, K, D = bases.shape
    lam_padded = _pad_lambdas(lambdas, basis_lengths, K, component_padding)
    x_res = jnp.take(x, residual_indices, axis=1) - means[None]              # (N, R, D)
    proj = jnp.einsum('nrd,rkd->nrk', x_res, bases * lam_padded[:, :, None])
    recon = jnp.einsum('nrk,rkd->nrd', proj, inv_bases)
    adapted = recon.sum(axis=1)
    x_abl = jnp.take(x, ablated_indices, axis=1)
    if ablation is None or ablation == 'sum':
        adapted = adapted + x_abl.sum(axis=1)
    elif ablation == 'mean':
        adapted = adapted + x_abl.mean(axis=0, keepdims=True).sum(axis=1)
    elif ablation == 'zero':
        pass
    return adapted


def _make_inv_bases(bases):
    # inverse_residual_bases = inv(B @ B^T) @ B   (K != D case)
    gram = jnp.einsum('rkd,rjd->rkj', bases, bases)                          # (R, K, K)
    return jnp.einsum('rkj,rjd->rkd', jnp.linalg.inv(gram), bases)           # (R, K, D)


# ---------------------------------------------------------------------------
# Tests
# ---------------------------------------------------------------------------
if __name__ == "__main__":
    key = jax.random.PRNGKey(0)

    def build_config(key, N, S, D, K, basis_lengths):
        kx, kb, km, kl = jax.random.split(key, 4)
        residual_indices_np = np.array([0, 2, 3, 5], dtype=np.int32)
        R = residual_indices_np.shape[0]
        residual_mask = np.zeros(S, dtype=bool)
        residual_mask[residual_indices_np] = True
        ablated_indices_np = np.nonzero(~residual_mask)[0].astype(np.int32)
        x = jax.random.normal(kx, (N, S, D), dtype=jnp.float32)
        bases = jax.random.normal(kb, (R, K, D), dtype=jnp.float32)
        means = jax.random.normal(km, (R, D), dtype=jnp.float32)
        n_lambdas = int(sum(basis_lengths))
        lambdas = jax.random.normal(kl, (n_lambdas,), dtype=jnp.float32) + 1.0
        inv_bases = _make_inv_bases(bases)
        return (x, jnp.asarray(residual_indices_np), jnp.asarray(ablated_indices_np),
                bases, inv_bases, means, lambdas, basis_lengths)

    # ---- Config A: small D (D=32 <= 128 -> fully fused single-matmul kernel) ----
    k1, k2 = jax.random.split(key)
    basis_lengths_a = [8, 5, 8, 3]
    cfg_a = build_config(k1, N=2, S=6, D=32, K=8, basis_lengths=basis_lengths_a)
    component_padding = 0

    for abl in [None, 'zero', 'mean']:
        ref = jax.block_until_ready(
            reference_forward(*cfg_a, component_padding, ablation=abl))
        out = jax.block_until_ready(
            residual_forward(*cfg_a, component_padding, ablation=abl,
                             compute_dtype=jnp.float32))
        assert out.shape == ref.shape, (out.shape, ref.shape)
        np.testing.assert_allclose(np.asarray(out), np.asarray(ref),
                                   rtol=1e-3, atol=1e-3)

    # bf16 input path (default): loose tolerance, input-quantization error only.
    ref = jax.block_until_ready(
        reference_forward(*cfg_a, component_padding, ablation=None))
    out_bf16 = jax.block_until_ready(
        residual_forward(*cfg_a, component_padding, ablation=None,
                         compute_dtype=jnp.bfloat16))
    np.testing.assert_allclose(np.asarray(out_bf16), np.asarray(ref),
                               rtol=1e-1, atol=5e-1)

    # ---- Config B: larger D (D=256 >> K=8 -> packed two-stage kernel) ----
    basis_lengths_b = [8, 5, 8, 3]
    cfg_b = build_config(k2, N=4, S=6, D=256, K=8, basis_lengths=basis_lengths_b)
    ref_b = jax.block_until_ready(
        reference_forward(*cfg_b, component_padding, ablation='sum'))
    out_b = jax.block_until_ready(
        residual_forward(*cfg_b, component_padding, ablation='sum',
                         compute_dtype=jnp.float32))
    assert out_b.shape == ref_b.shape, (out_b.shape, ref_b.shape)
    np.testing.assert_allclose(np.asarray(out_b), np.asarray(ref_b),
                               rtol=1e-3, atol=1e-3)

    print("KERNEL_OK")
</pallas_src>

<mosaic_0001>
module attributes {stable_mosaic.version = 11 : i64} {
  func.func @residual_fused_kernel(%arg0: i32, %arg1: memref<2x128xf32, #tpu.memory_space<vmem>>, %arg2: memref<128x32xf32, #tpu.memory_space<vmem>>, %arg3: memref<2x32xf32, #tpu.memory_space<vmem>>, %arg4: memref<2x32xf32, #tpu.memory_space<vmem>>) attributes {dimension_semantics = [#tpu.dimension_semantics<parallel>], iteration_bounds = array<i64: 1>, scalar_prefetch = 0 : i64, scratch_operands = 0 : i64, tpu.core_type = #tpu.core_type<tc>, window_params = [{transform_indices = @transform_0, window_bounds = array<i64: 2, 128>}, {pipeline_mode = #tpu.pipeline_mode<synchronous>, transform_indices = @transform_1, window_bounds = array<i64: 128, 32>}, {transform_indices = @transform_2, window_bounds = array<i64: 2, 32>}, {transform_indices = @transform_3, window_bounds = array<i64: 2, 32>}]} {
    %c0 = arith.constant 0 : index
    %c0_0 = arith.constant 0 : index
    %0 = vector.load %arg1[%c0, %c0_0] : memref<2x128xf32, #tpu.memory_space<vmem>>, vector<2x128xf32>
    %c0_1 = arith.constant 0 : index
    %c0_2 = arith.constant 0 : index
    %1 = vector.load %arg2[%c0_1, %c0_2] : memref<128x32xf32, #tpu.memory_space<vmem>>, vector<128x32xf32>
    %cst = arith.constant dense<0.000000e+00> : vector<2x32xf32>
    %2 = tpu.matmul %0, %1, %cst {dimension_numbers = #tpu.dot_dimension_numbers<[1], [0], [0], [1], [0, 0, 1, 1], [], []>} : vector<2x128xf32>, vector<128x32xf32>, vector<2x32xf32> -> vector<2x32xf32>
    %c0_3 = arith.constant 0 : index
    %c0_4 = arith.constant 0 : index
    %3 = vector.load %arg3[%c0_3, %c0_4] : memref<2x32xf32, #tpu.memory_space<vmem>>, vector<2x32xf32>
    %4 = arith.addf %3, %2 : vector<2x32xf32>
    %c0_5 = arith.constant 0 : index
    %c0_6 = arith.constant 0 : index
    %5 = vector.load %arg4[%c0_5, %c0_6] : memref<2x32xf32, #tpu.memory_space<vmem>>, vector<2x32xf32>
    tpu.vector_store %arg4[%c0_5, %c0_6], %4 {strides = array<i32>} : memref<2x32xf32, #tpu.memory_space<vmem>>, vector<2x32xf32>,
    return
  }
  func.func @transform_0(%arg0: i32) -> (i32, i32) {
    %c0_i32 = arith.constant 0 : i32
    %c0_i32_0 = arith.constant 0 : i32
    return %arg0, %c0_i32 : i32, i32
  }
  func.func @transform_1(%arg0: i32) -> (i32, i32) {
    %c0_i32 = arith.constant 0 : i32
    %c0_i32_0 = arith.constant 0 : i32
    %c0_i32_1 = arith.constant 0 : i32
    return %c0_i32, %c0_i32_0 : i32, i32
  }
  func.func @transform_2(%arg0: i32) -> (i32, i32) {
    %c0_i32 = arith.constant 0 : i32
    %c0_i32_0 = arith.constant 0 : i32
    return %arg0, %c0_i32 : i32, i32
  }
  func.func @transform_3(%arg0: i32) -> (i32, i32) {
    %c0_i32 = arith.constant 0 : i32
    %c0_i32_0 = arith.constant 0 : i32
    return %arg0, %c0_i32 : i32, i32
  }
}

</mosaic_0001>

<llo_original>
// kernel: tpu_custom_call.1
$region0: #{tpu_custom_call.1}
  #allocation0 [shape = 'u32[]', space=smem, size = 0x4, offset = 0x4, fixed_abs, tag = 'smem constant byte address 0x4 - core index']
  #allocation1 [shape = 'u32[72,128]{1,0:T(1,128)}', space=vmem, size = 0x9000, scoped, tag = 'internal scratch']
  %s0 = inlined_call_operand.vmem [shape: f32[2,128], index: 0, kind: input, shape index: {}]
  %s1 = inlined_call_operand.vmem [shape: f32[128,32], index: 1, kind: input, shape index: {}]
  %s2 = inlined_call_operand.vmem [shape: f32[2,32], index: 2, kind: input, shape index: {}]
  %s3 = inlined_call_operand.hbm [shape: f32[2,32], index: 3, kind: output, shape index: {}]
  %s4 = sld [smem:[#allocation0]]
  $region22: #{tpu_custom_call.1} parent=0
    _
  %s6 = ssub.s32 1, %s4
  %s7 = scalar_select 0, %s6, %s4
  $region1: #{tpu_custom_call.1} parent=0
    #allocation2 [shape = 'u8[1024]{0}', space=vmem, size = 0x400, scoped, tag = 'output window, operand 0, single buffered']
    #allocation3 [shape = 's32[1]{0}', space=sflag, size = 0x4, scoped, tag = 'scoped memory for tpu_custom_call.1']
    %8 = vsyncpa [#allocation3], 0
    // Predicated region
    $region2: #{tpu_custom_call.1} parent=1 // pred_check
      _
    $region3: #{tpu_custom_call.1} parent=1 // pred_check_branch
      %10 = sbr.rel (0) target = $region5
    $region4: #{tpu_custom_call.1} parent=1 // pred_region
      _
    $region5: #{tpu_custom_call.1} parent=1 // pred_fallthru
      _
    // Predicated region
    $region6: #{tpu_custom_call.1} parent=1 // pred_check
      _
    $region7: #{tpu_custom_call.1} parent=1 // pred_check_branch
      %12 = sbr.rel (0) target = $region9
    $region8: #{tpu_custom_call.1} parent=1 // pred_region
      _
    $region9: #{tpu_custom_call.1} parent=1 // pred_fallthru
      _
    // Predicated region
    $region10: #{tpu_custom_call.1} parent=1 // pred_check
      _
    $region11: #{tpu_custom_call.1} parent=1 // pred_check_branch
      %14 = sbr.rel (0) target = $region13
    $region12: #{tpu_custom_call.1} parent=1 // pred_region
      _
    $region13: #{tpu_custom_call.1} parent=1 // pred_fallthru
      _
    %v15 = vld [vmem:[%s0] sm:$0x3]
    %v16 = vld [vmem:[%s1] sm:$0xff]
    %v17 = vld [vmem:[%s1 + $0x8] sm:$0xff]
    %v18 = vld [vmem:[%s1 + $0x10] sm:$0xff]
    %v19 = vld [vmem:[%s1 + $0x18] sm:$0xff]
    %v20 = vld [vmem:[%s1 + $0x20] sm:$0xff]
    %v21 = vld [vmem:[%s1 + $0x28] sm:$0xff]
    %v22 = vld [vmem:[%s1 + $0x30] sm:$0xff]
    %v23 = vld [vmem:[%s1 + $0x38] sm:$0xff]
    %v24 = vld [vmem:[%s1 + $0x40] sm:$0xff]
    %v25 = vld [vmem:[%s1 + $0x48] sm:$0xff]
    %v26 = vld [vmem:[%s1 + $0x50] sm:$0xff]
    %v27 = vld [vmem:[%s1 + $0x58] sm:$0xff]
    %v28 = vld [vmem:[%s1 + $0x60] sm:$0xff]
    %v29 = vld [vmem:[%s1 + $0x68] sm:$0xff]
    %v30 = vld [vmem:[%s1 + $0x70] sm:$0xff]
    %v31 = vld [vmem:[%s1 + $0x78] sm:$0xff]
    %32 = vmatpush.msra.mxu0 %v31
    %33 = vmatpush.msra.mxu0 %v30
    %34 = vmatpush.msra.mxu0 %v29
    %35 = vmatpush.msra.mxu0 %v28
    %36 = vmatpush.msra.mxu0 %v27
    %37 = vmatpush.msra.mxu0 %v26
    %38 = vmatpush.msra.mxu0 %v25
    %39 = vmatpush.msra.mxu0 %v24
    %40 = vmatpush.msra.mxu0 %v23
    %41 = vmatpush.msra.mxu0 %v22
    %42 = vmatpush.msra.mxu0 %v21
    %43 = vmatpush.msra.mxu0 %v20
    %44 = vmatpush.msra.mxu0 %v19
    %45 = vmatpush.msra.mxu0 %v18
    %46 = vmatpush.msra.mxu0 %v17
    %47 = vmatpush.msra.mxu0 %v16
    %48 = vmatmul.f32.gmra.mxu0 %v15
    %v49 = vpop.f32.mrf.mxu0
    %v50 = vadd.f32 0.0, %v49
    %51 = vdwg.mxu0
    %v52 = vld [vmem:[%s2] sm:$0x3]
    %v53 = vadd.f32 %v52, %v50
    %vm54 = vcmask 254976
    %55 = vst.msk [vmem:[#allocation2] sm:$0x3] %vm54, %v53
    // Predicated region
    $region14: #{tpu_custom_call.1} parent=1 // pred_check
      _
    $region15: #{tpu_custom_call.1} parent=1 // pred_check_branch
      %57 = sbr.rel (0) target = $region17
    $region16: #{tpu_custom_call.1} parent=1 // pred_region
      %59 = vsyncadd [#allocation3], 0
      %s61 = sshll.u32 [#allocation2], 4
      %s62 = int_to_ptr.vmem [resolvable:$true] %s61
      %s63 = sshll.u32 %s3, 4
      %s64 = int_to_ptr.hbm [resolvable:$true] %s63
      %66 = dma.vmem_to_hbm [thread:$0]  %s62, 32, %s64, [#allocation3]
    $region17: #{tpu_custom_call.1} parent=1 // pred_fallthru
      _
    // Predicated region
    $region18: #{tpu_custom_call.1} parent=1 // pred_check
      _
    $region19: #{tpu_custom_call.1} parent=1 // pred_check_branch
      %68 = sbr.rel (0) target = $region21
    $region20: #{tpu_custom_call.1} parent=1 // pred_region
      %70 = dma.done [#allocation3], 32
    $region21: #{tpu_custom_call.1} parent=1 // pred_fallthru
      _
    %71 = vsyncpa [#allocation3], 1

</llo_original>
